<compile_context>
chip_gen: v7x
topology: tpu7x:2x2x1
jax: 0.10.0
libtpu: 0.0.40
codegen_flags: <defaults>
</compile_context>

<pallas_src>
import functools

import jax
import jax.numpy as jnp
from jax import lax
from jax.experimental import pallas as pl
from jax.experimental.pallas import tpu as pltpu


def _round_up(a, m):
    return -(-a // m) * m


def smartrun_kernel(x_ref, w1_ref, b1_ref, w2_ref, b2_ref, w3_ref, b3_ref,
                    o_ref, acc_ref, *, td, d_rem):
    k = pl.program_id(1)
    n_k = pl.num_programs(1)

    @pl.when(k == 0)
    def _():
        acc_ref[...] = jnp.zeros_like(acc_ref)

    x = x_ref[...]        # [TB, TD]
    w1 = w1_ref[...]      # [TD, 16]
    if d_rem:             # static: D % TD != 0 -> mask the ragged tail K block
        lim = jnp.where(k == n_k - 1, d_rem, td)
        col = lax.broadcasted_iota(jnp.int32, x.shape, 1)
        x = jnp.where(col < lim, x, 0.0)
        row = lax.broadcasted_iota(jnp.int32, w1.shape, 0)
        w1 = jnp.where(row < lim, w1, 0.0)

    # Layer-1 partial sum over the feature (K) axis, f32 accumulation.
    acc_ref[...] += jnp.dot(x, w1, preferred_element_type=jnp.float32)

    @pl.when(k == n_k - 1)
    def _():
        h1 = jnp.maximum(acc_ref[...] + b1_ref[...], 0.0)                 # [TB,16]
        h2 = jnp.maximum(
            jnp.dot(h1, w2_ref[...], preferred_element_type=jnp.float32)
            + b2_ref[...], 0.0)                                           # [TB, 8]
        y = (jnp.dot(h2, w3_ref[...], preferred_element_type=jnp.float32)
             + b3_ref[...])                                               # [TB, 1]
        o_ref[...] = y.astype(o_ref.dtype)


def smartrun_forward(x, params, *, block_bytes=2 << 20, max_td=2048):
    """x: [B, D]; params: w1 [D,16], b1 [16], w2 [16,8], b2 [8], w3 [8,1], b3 [1]."""
    B, D = x.shape
    w1, w2, w3 = params["w1"], params["w2"], params["w3"]
    b1 = params["b1"].reshape(1, -1)
    b2 = params["b2"].reshape(1, -1)
    b3 = params["b3"].reshape(1, -1)
    itemsize = jnp.dtype(x.dtype).itemsize

    LANE, SUB = 128, 8

    # --- K (feature) tiling: bound the x block size for very large D. ---
    TD = D if D <= max_td else max_td            # max_td is a multiple of 128
    n_k = -(-D // TD)
    d_rem = D % TD

    # --- Batch tile: ~block_bytes per (lane-padded) x buffer. ---
    bytes_per_row = _round_up(TD, LANE) * itemsize         # true VMEM row cost
    target_rows = max(128, (block_bytes // bytes_per_row) // 128 * 128)
    if B <= target_rows:
        TB = B                                   # single tile (== full dim: legal)
    else:
        TB = target_rows
        n_b = -(-B // TB)
        if n_b % 2 == 1:                         # balance v7x's two TensorCores
            n_b += 1
            TB = _round_up(-(-B // n_b), SUB)
    n_b = -(-B // TB)

    # --- VMEM budget (padded, double-buffered) -> explicit limit. ---
    x_block = _round_up(TB, SUB) * _round_up(TD, LANE) * itemsize
    o_block = _round_up(TB, SUB) * LANE * itemsize
    w1_block = _round_up(TD, SUB) * LANE * itemsize
    acc_block = _round_up(TB, SUB) * LANE * 4
    vmem_bytes = 2 * (x_block + o_block + w1_block) + acc_block + (2 << 20)
    vmem_limit = int(min(48 << 20, max(32 << 20, vmem_bytes)))

    const2d = lambda arr: pl.BlockSpec(arr.shape, lambda i, k: (0, 0))
    kernel = functools.partial(smartrun_kernel, td=TD, d_rem=d_rem)

    return pl.pallas_call(
        kernel,
        out_shape=jax.ShapeDtypeStruct((B, 1), x.dtype),
        grid_spec=pltpu.PrefetchScalarGridSpec(
            num_scalar_prefetch=0,
            grid=(n_b, n_k),
            in_specs=[
                pl.BlockSpec((TB, TD), lambda i, k: (i, k)),   # x streamed per tile
                pl.BlockSpec((TD, 16), lambda i, k: (k, 0)),   # w1 (K-tiled)
                const2d(b1),                                   # resident small params
                const2d(w2), const2d(b2),
                const2d(w3), const2d(b3),
            ],
            out_specs=pl.BlockSpec((TB, 1), lambda i, k: (i, 0)),
            scratch_shapes=[pltpu.VMEM((TB, 16), jnp.float32)],
        ),
        compiler_params=pltpu.CompilerParams(
            dimension_semantics=("parallel", "arbitrary"),   # megacore on batch tiles
            vmem_limit_bytes=vmem_limit,
        ),
    )(x, w1, b1, w2, b2, w3, b3)


def init_params(key, input_size):
    """Deterministic synthetic init matching PyTorch layer shapes (W as [in, out])."""
    k1, k2, k3, k4, k5, k6 = jax.random.split(key, 6)
    s1 = 1.0 / jnp.sqrt(input_size)
    s2 = 1.0 / jnp.sqrt(16.0)
    s3 = 1.0 / jnp.sqrt(8.0)
    return {
        "w1": jax.random.uniform(k1, (input_size, 16), jnp.float32, -s1, s1),
        "b1": jax.random.uniform(k2, (16,), jnp.float32, -s1, s1),
        "w2": jax.random.uniform(k3, (16, 8), jnp.float32, -s2, s2),
        "b2": jax.random.uniform(k4, (8,), jnp.float32, -s2, s2),
        "w3": jax.random.uniform(k5, (8, 1), jnp.float32, -s3, s3),
        "b3": jax.random.uniform(k6, (1,), jnp.float32, -s3, s3),
    }


def reference_forward(x, p):
    h1 = jnp.maximum(x @ p["w1"] + p["b1"], 0.0)
    h2 = jnp.maximum(h1 @ p["w2"] + p["b2"], 0.0)
    return h2 @ p["w3"] + p["b3"]


if __name__ == "__main__":
    key = jax.random.PRNGKey(0)
    kx, kp, k2, k3, kp3 = jax.random.split(key, 5)

    # Base case: small batch, D=32 (single tile, single K block).
    batch, input_size = 8, 32
    x = jax.random.normal(kx, (batch, input_size), dtype=jnp.float32)
    params = init_params(kp, input_size)
    out = jax.block_until_ready(smartrun_forward(x, params))
    ref = reference_forward(x, params)
    assert out.shape == (batch, 1)
    assert jnp.allclose(out, ref, atol=1e-5, rtol=1e-5)

    # Multi batch-tile pipelined path with a ragged tail (no wrapper padding),
    # even grid for the megacore split; small block_bytes forces grid > 1.
    x2 = jax.random.normal(k2, (1000, input_size), dtype=jnp.float32)
    out2 = jax.block_until_ready(smartrun_forward(x2, params, block_bytes=1 << 16))
    ref2 = reference_forward(x2, params)
    assert out2.shape == (1000, 1)
    assert jnp.allclose(out2, ref2, atol=1e-5, rtol=1e-5)

    # K-tiled path (D > max_td) with a ragged, masked tail K block.
    d3, b3_ = 200, 96
    params3 = init_params(kp3, d3)
    x3 = jax.random.normal(k3, (b3_, d3), dtype=jnp.float32)
    out3 = jax.block_until_ready(
        smartrun_forward(x3, params3, block_bytes=1 << 14, max_td=128))
    ref3 = reference_forward(x3, params3)
    assert out3.shape == (b3_, 1)
    assert jnp.allclose(out3, ref3, atol=1e-4, rtol=1e-4)

    print("KERNEL_OK")
</pallas_src>

<mosaic_0001>
module attributes {stable_mosaic.version = 11 : i64} {
  func.func @smartrun_kernel(%arg0: i32, %arg1: i32, %arg2: memref<8x32xf32, #tpu.memory_space<vmem>>, %arg3: memref<32x16xf32, #tpu.memory_space<vmem>>, %arg4: memref<1x16xf32, #tpu.memory_space<vmem>>, %arg5: memref<16x8xf32, #tpu.memory_space<vmem>>, %arg6: memref<1x8xf32, #tpu.memory_space<vmem>>, %arg7: memref<8x1xf32, #tpu.memory_space<vmem>>, %arg8: memref<1x1xf32, #tpu.memory_space<vmem>>, %arg9: memref<8x1xf32, #tpu.memory_space<vmem>>, %arg10: memref<8x16xf32, #tpu.memory_space<vmem>>) attributes {dimension_semantics = [#tpu.dimension_semantics<parallel>, #tpu.dimension_semantics<arbitrary>], iteration_bounds = array<i64: 1, 1>, scalar_prefetch = 0 : i64, scratch_operands = 1 : i64, tpu.core_type = #tpu.core_type<tc>, window_params = [{transform_indices = @transform_0, window_bounds = array<i64: 8, 32>}, {transform_indices = @transform_1, window_bounds = array<i64: 32, 16>}, {pipeline_mode = #tpu.pipeline_mode<synchronous>, transform_indices = @transform_2, window_bounds = array<i64: 1, 16>}, {pipeline_mode = #tpu.pipeline_mode<synchronous>, transform_indices = @transform_3, window_bounds = array<i64: 16, 8>}, {pipeline_mode = #tpu.pipeline_mode<synchronous>, transform_indices = @transform_4, window_bounds = array<i64: 1, 8>}, {pipeline_mode = #tpu.pipeline_mode<synchronous>, transform_indices = @transform_5, window_bounds = array<i64: 8, 1>}, {pipeline_mode = #tpu.pipeline_mode<synchronous>, transform_indices = @transform_6, window_bounds = array<i64: 1, 1>}, {transform_indices = @transform_7, window_bounds = array<i64: 8, 1>}]} {
    %c0_i32 = arith.constant 0 : i32
    %0 = arith.cmpi eq, %arg1, %c0_i32 : i32
    %1 = arith.extui %0 : i1 to i32
    %c0_i32_0 = arith.constant 0 : i32
    %2 = arith.cmpi ne, %1, %c0_i32_0 : i32
    scf.if %2 {
      %cst_10 = arith.constant 0.000000e+00 : f32
      %12 = vector.broadcast %cst_10 : f32 to vector<8x16xf32>
      %c0_11 = arith.constant 0 : index
      %c0_12 = arith.constant 0 : index
      %13 = vector.load %arg10[%c0_11, %c0_12] : memref<8x16xf32, #tpu.memory_space<vmem>>, vector<8x16xf32>
      tpu.vector_store %arg10[%c0_11, %c0_12], %12 {strides = array<i32>} : memref<8x16xf32, #tpu.memory_space<vmem>>, vector<8x16xf32>,
    } else {
    }
    %c0 = arith.constant 0 : index
    %c0_1 = arith.constant 0 : index
    %3 = vector.load %arg2[%c0, %c0_1] : memref<8x32xf32, #tpu.memory_space<vmem>>, vector<8x32xf32>
    %c0_2 = arith.constant 0 : index
    %c0_3 = arith.constant 0 : index
    %4 = vector.load %arg3[%c0_2, %c0_3] : memref<32x16xf32, #tpu.memory_space<vmem>>, vector<32x16xf32>
    %c0_4 = arith.constant 0 : index
    %c0_5 = arith.constant 0 : index
    %5 = vector.load %arg10[%c0_4, %c0_5] : memref<8x16xf32, #tpu.memory_space<vmem>>, vector<8x16xf32>
    %cst = arith.constant dense<0.000000e+00> : vector<8x16xf32>
    %6 = tpu.matmul %3, %4, %cst {dimension_numbers = #tpu.dot_dimension_numbers<[1], [0], [0], [1], [0, 0, 1, 1], [], []>} : vector<8x32xf32>, vector<32x16xf32>, vector<8x16xf32> -> vector<8x16xf32>
    %7 = arith.addf %5, %6 : vector<8x16xf32>
    %c0_6 = arith.constant 0 : index
    %c0_7 = arith.constant 0 : index
    %8 = vector.load %arg10[%c0_6, %c0_7] : memref<8x16xf32, #tpu.memory_space<vmem>>, vector<8x16xf32>
    tpu.vector_store %arg10[%c0_6, %c0_7], %7 {strides = array<i32>} : memref<8x16xf32, #tpu.memory_space<vmem>>, vector<8x16xf32>,
    %c0_i32_8 = arith.constant 0 : i32
    %9 = arith.cmpi eq, %arg1, %c0_i32_8 : i32
    %10 = arith.extui %9 : i1 to i32
    %c0_i32_9 = arith.constant 0 : i32
    %11 = arith.cmpi ne, %10, %c0_i32_9 : i32
    scf.if %11 {
      %c0_10 = arith.constant 0 : index
      %c0_11 = arith.constant 0 : index
      %12 = vector.load %arg10[%c0_10, %c0_11] : memref<8x16xf32, #tpu.memory_space<vmem>>, vector<8x16xf32>
      %c0_12 = arith.constant 0 : index
      %c0_13 = arith.constant 0 : index
      %13 = vector.load %arg4[%c0_12, %c0_13] : memref<1x16xf32, #tpu.memory_space<vmem>>, vector<1x16xf32>
      %14 = vector.broadcast %13 : vector<1x16xf32> to vector<8x16xf32>
      %15 = arith.addf %12, %14 : vector<8x16xf32>
      %cst_14 = arith.constant 0.000000e+00 : f32
      %16 = vector.broadcast %cst_14 : f32 to vector<8x16xf32>
      %17 = arith.maximumf %15, %16 : vector<8x16xf32>
      %c0_15 = arith.constant 0 : index
      %c0_16 = arith.constant 0 : index
      %18 = vector.load %arg5[%c0_15, %c0_16] : memref<16x8xf32, #tpu.memory_space<vmem>>, vector<16x8xf32>
      %cst_17 = arith.constant dense<0.000000e+00> : vector<8x8xf32>
      %19 = tpu.matmul %17, %18, %cst_17 {dimension_numbers = #tpu.dot_dimension_numbers<[1], [0], [0], [1], [0, 0, 1, 1], [], []>} : vector<8x16xf32>, vector<16x8xf32>, vector<8x8xf32> -> vector<8x8xf32>
      %c0_18 = arith.constant 0 : index
      %c0_19 = arith.constant 0 : index
      %20 = vector.load %arg6[%c0_18, %c0_19] : memref<1x8xf32, #tpu.memory_space<vmem>>, vector<1x8xf32>
      %21 = vector.broadcast %20 : vector<1x8xf32> to vector<8x8xf32>
      %22 = arith.addf %19, %21 : vector<8x8xf32>
      %cst_20 = arith.constant 0.000000e+00 : f32
      %23 = vector.broadcast %cst_20 : f32 to vector<8x8xf32>
      %24 = arith.maximumf %22, %23 : vector<8x8xf32>
      %c0_21 = arith.constant 0 : index
      %c0_22 = arith.constant 0 : index
      %25 = vector.load %arg7[%c0_21, %c0_22] : memref<8x1xf32, #tpu.memory_space<vmem>>, vector<8x1xf32>
      %cst_23 = arith.constant dense<0.000000e+00> : vector<8x1xf32>
      %26 = tpu.matmul %24, %25, %cst_23 {dimension_numbers = #tpu.dot_dimension_numbers<[1], [0], [0], [1], [0, 0, 1, 1], [], []>} : vector<8x8xf32>, vector<8x1xf32>, vector<8x1xf32> -> vector<8x1xf32>
      %c0_24 = arith.constant 0 : index
      %c0_25 = arith.constant 0 : index
      %27 = vector.load %arg8[%c0_24, %c0_25] : memref<1x1xf32, #tpu.memory_space<vmem>>, vector<1x1xf32>
      %28 = vector.broadcast %27 : vector<1x1xf32> to vector<8x1xf32>
      %29 = arith.addf %26, %28 : vector<8x1xf32>
      %c0_26 = arith.constant 0 : index
      %c0_27 = arith.constant 0 : index
      %30 = vector.load %arg9[%c0_26, %c0_27] : memref<8x1xf32, #tpu.memory_space<vmem>>, vector<8x1xf32>
      tpu.vector_store %arg9[%c0_26, %c0_27], %29 {strides = array<i32>} : memref<8x1xf32, #tpu.memory_space<vmem>>, vector<8x1xf32>,
    } else {
    }
    return
  }
  func.func @transform_0(%arg0: i32, %arg1: i32) -> (i32, i32) {
    %c0_i32 = arith.constant 0 : i32
    return %arg0, %arg1 : i32, i32
  }
  func.func @transform_1(%arg0: i32, %arg1: i32) -> (i32, i32) {
    %c0_i32 = arith.constant 0 : i32
    %c0_i32_0 = arith.constant 0 : i32
    return %arg1, %c0_i32 : i32, i32
  }
  func.func @transform_2(%arg0: i32, %arg1: i32) -> (i32, i32) {
    %c0_i32 = arith.constant 0 : i32
    %c0_i32_0 = arith.constant 0 : i32
    %c0_i32_1 = arith.constant 0 : i32
    return %c0_i32, %c0_i32_0 : i32, i32
  }
  func.func @transform_3(%arg0: i32, %arg1: i32) -> (i32, i32) {
    %c0_i32 = arith.constant 0 : i32
    %c0_i32_0 = arith.constant 0 : i32
    %c0_i32_1 = arith.constant 0 : i32
    return %c0_i32, %c0_i32_0 : i32, i32
  }
  func.func @transform_4(%arg0: i32, %arg1: i32) -> (i32, i32) {
    %c0_i32 = arith.constant 0 : i32
    %c0_i32_0 = arith.constant 0 : i32
    %c0_i32_1 = arith.constant 0 : i32
    return %c0_i32, %c0_i32_0 : i32, i32
  }
  func.func @transform_5(%arg0: i32, %arg1: i32) -> (i32, i32) {
    %c0_i32 = arith.constant 0 : i32
    %c0_i32_0 = arith.constant 0 : i32
    %c0_i32_1 = arith.constant 0 : i32
    return %c0_i32, %c0_i32_0 : i32, i32
  }
  func.func @transform_6(%arg0: i32, %arg1: i32) -> (i32, i32) {
    %c0_i32 = arith.constant 0 : i32
    %c0_i32_0 = arith.constant 0 : i32
    %c0_i32_1 = arith.constant 0 : i32
    return %c0_i32, %c0_i32_0 : i32, i32
  }
  func.func @transform_7(%arg0: i32, %arg1: i32) -> (i32, i32) {
    %c0_i32 = arith.constant 0 : i32
    %c0_i32_0 = arith.constant 0 : i32
    return %arg0, %c0_i32 : i32, i32
  }
}

</mosaic_0001>

<llo_original>
// kernel: tpu_custom_call.1
$region0: #{tpu_custom_call.1}
  #allocation0 [shape = 'u32[]', space=smem, size = 0x4, offset = 0x4, fixed_abs, tag = 'smem constant byte address 0x4 - core index']
  #allocation1 [shape = 'u32[144,128]{1,0:T(1,128)}', space=vmem, size = 0x12000, scoped, tag = 'internal scratch']
  #allocation2 [shape = 'f32[8,16]{1,0:T(8,128)}', space=vmem, size = 0x1000, scoped, tag = 'scratch operand']
  #allocation3 [shape = 'f32[1,1]{1,0:T(1,128)S(1)}', space=vmem, size = 0x200, scoped, tag = 'scoped memory for tpu_custom_call.1']
  %s0 = inlined_call_operand.vmem [shape: f32[8,32], index: 0, kind: input, shape index: {}]
  %s1 = inlined_call_operand.vmem [shape: f32[32,16], index: 1, kind: input, shape index: {}]
  %s2 = inlined_call_operand.vmem [shape: f32[1,16], index: 2, kind: input, shape index: {}]
  %s3 = inlined_call_operand.vmem [shape: f32[16,8], index: 3, kind: input, shape index: {}]
  %s4 = inlined_call_operand.vmem [shape: f32[1,8], index: 4, kind: input, shape index: {}]
  %s5 = inlined_call_operand.vmem [shape: f32[8,1], index: 5, kind: input, shape index: {}]
  %s6 = inlined_call_operand.<no memory space> [shape: f32[1,1], index: 6, kind: input, shape index: {}]
  %s7 = inlined_call_operand.vmem [shape: f32[8,1], index: 7, kind: output, shape index: {}]
  %s8 = sld [smem:[#allocation0]]
  $region46: #{tpu_custom_call.1} parent=0
    _
  %s10 = ssub.s32 1, %s8
  %s11 = scalar_select 0, %s10, %s8
  %v12 = vstv %s6
  %13 = vst [vmem:[#allocation3] sm:$0x1] %v12
  // Predicated region
  $region2: #{tpu_custom_call.1} parent=0 // pred_check
    _
  $region3: #{tpu_custom_call.1} parent=0 // pred_check_branch
    %15 = sbr.rel (0) target = $region5
  $region4: #{tpu_custom_call.1} parent=0 // pred_region
    _
  $region5: #{tpu_custom_call.1} parent=0 // pred_fallthru
    _
  // Predicated region
  $region6: #{tpu_custom_call.1} parent=0 // pred_check
    _
  $region7: #{tpu_custom_call.1} parent=0 // pred_check_branch
    %17 = sbr.rel (0) target = $region9
  $region8: #{tpu_custom_call.1} parent=0 // pred_region
    _
  $region9: #{tpu_custom_call.1} parent=0 // pred_fallthru
    _
  // Predicated region
  $region10: #{tpu_custom_call.1} parent=0 // pred_check
    _
  $region11: #{tpu_custom_call.1} parent=0 // pred_check_branch
    %19 = sbr.rel (0) target = $region13
  $region12: #{tpu_custom_call.1} parent=0 // pred_region
    _
  $region13: #{tpu_custom_call.1} parent=0 // pred_fallthru
    _
  // Predicated region
  $region14: #{tpu_custom_call.1} parent=0 // pred_check
    _
  $region15: #{tpu_custom_call.1} parent=0 // pred_check_branch
    %21 = sbr.rel (0) target = $region17
  $region16: #{tpu_custom_call.1} parent=0 // pred_region
    _
  $region17: #{tpu_custom_call.1} parent=0 // pred_fallthru
    _
  // Predicated region
  $region18: #{tpu_custom_call.1} parent=0 // pred_check
    _
  $region19: #{tpu_custom_call.1} parent=0 // pred_check_branch
    %23 = sbr.rel (0) target = $region21
  $region20: #{tpu_custom_call.1} parent=0 // pred_region
    _
  $region21: #{tpu_custom_call.1} parent=0 // pred_fallthru
    _
  // Predicated region
  $region22: #{tpu_custom_call.1} parent=0 // pred_check
    _
  $region23: #{tpu_custom_call.1} parent=0 // pred_check_branch
    %25 = sbr.rel (0) target = $region25
  $region24: #{tpu_custom_call.1} parent=0 // pred_region
    _
  $region25: #{tpu_custom_call.1} parent=0 // pred_fallthru
    _
  // Predicated region
  $region26: #{tpu_custom_call.1} parent=0 // pred_check
    _
  $region27: #{tpu_custom_call.1} parent=0 // pred_check_branch
    %27 = sbr.rel (0) target = $region29
  $region28: #{tpu_custom_call.1} parent=0 // pred_region
    _
  $region29: #{tpu_custom_call.1} parent=0 // pred_fallthru
    _
  %p28 = scmp.eq.s32.totalorder 0, 0
  // Predicated region
  $region30: #{tpu_custom_call.1} parent=0 // pred_check
    %p29 = pneg %p28
  $region31: #{tpu_custom_call.1} parent=0 // pred_check_branch
    %31 = sbr.rel (%p29) target = $region33
  $region32: #{tpu_custom_call.1} parent=0 // pred_region
    %vm32 = vcmask 130048
    %33 = vst.msk [vmem:[#allocation2] sm:$0xff] %vm32, 0.0
  $region33: #{tpu_custom_call.1} parent=0 // pred_fallthru
    _
  %v34 = vld [vmem:[%s0] sm:$0xff]
  %v35 = vld [vmem:[%s1] sm:$0xff]
  %v36 = vld [vmem:[%s1 + $0x8] sm:$0xff]
  %v37 = vld [vmem:[%s1 + $0x10] sm:$0xff]
  %v38 = vld [vmem:[%s1 + $0x18] sm:$0xff]
  %v39 = vld [vmem:[#allocation2] sm:$0xff]
  %vm40 = vcmask 261120
  %v42 = vsel %vm40, %v34, 0
  %44 = vmatprep.subr.mxu0 0.0
  %45 = vmatpush1.msra.mxu0 %v35
  %46 = vmatprep.subr.mxu0 0.0
  %47 = vmatpush1.msra.mxu0 %v36
  %48 = vmatprep.subr.mxu0 0.0
  %49 = vmatpush1.msra.mxu0 %v37
  %50 = vmatprep.subr.mxu0 0.0
  %51 = vmatpush1.msra.mxu0 %v38
  %52 = vmatprep.subr.mxu0 0.0
  %53 = vmatpush1.msra.mxu0 0.0
  %54 = vmatprep.subr.mxu0 0.0
  %55 = vmatpush1.msra.mxu0 0.0
  %56 = vmatprep.subr.mxu0 0.0
  %57 = vmatpush1.msra.mxu0 0.0
  %58 = vmatprep.subr.mxu0 0.0
  %59 = vmatpush1.msra.mxu0 0.0
  %60 = vmatprep.subr.mxu0 0.0
  %61 = vmatpush1.msra.mxu0 0.0
  %62 = vmatprep.subr.mxu0 0.0
  %63 = vmatpush1.msra.mxu0 0.0
  %64 = vmatprep.subr.mxu0 0.0
  %65 = vmatpush1.msra.mxu0 0.0
  %66 = vmatprep.subr.mxu0 0.0
  %67 = vmatpush1.msra.mxu0 0.0
  %68 = vmatprep.subr.mxu0 0.0
  %69 = vmatpush1.msra.mxu0 0.0
  %70 = vmatprep.subr.mxu0 0.0
  %71 = vmatpush1.msra.mxu0 0.0
  %72 = vmatprep.subr.mxu0 0.0
  %73 = vmatpush1.msra.mxu0 0.0
  %74 = vmatprep.subr.mxu0 0.0
  %75 = vmatpush1.msra.mxu0 0.0
  %76 = vmatprep.subr.mxu0 0.0
  %77 = vmatpush1.msra.mxu0 0.0
  %78 = vmatprep.subr.mxu0 0.0
  %79 = vmatpush1.msra.mxu0 0.0
  %80 = vmatprep.subr.mxu0 0.0
  %81 = vmatpush1.msra.mxu0 0.0
  %82 = vmatprep.subr.mxu0 0.0
  %83 = vmatpush1.msra.mxu0 0.0
  %84 = vmatprep.subr.mxu0 0.0
  %85 = vmatpush1.msra.mxu0 0.0
  %86 = vmatprep.subr.mxu0 0.0
  %87 = vmatpush1.msra.mxu0 0.0
  %88 = vmatprep.subr.mxu0 0.0
  %89 = vmatpush1.msra.mxu0 0.0
  %90 = vmatprep.subr.mxu0 0.0
  %91 = vmatpush1.msra.mxu0 0.0
  %92 = vmatprep.subr.mxu0 0.0
  %93 = vmatpush1.msra.mxu0 0.0
  %94 = vmatprep.subr.mxu0 0.0
  %95 = vmatpush1.msra.mxu0 0.0
  %96 = vmatprep.subr.mxu0 0.0
  %97 = vmatpush1.msra.mxu0 0.0
  %98 = vmatprep.subr.mxu0 0.0
  %99 = vmatpush1.msra.mxu0 0.0
  %100 = vmatprep.subr.mxu0 0.0
  %101 = vmatpush1.msra.mxu0 0.0
  %102 = vmatprep.subr.mxu0 0.0
  %103 = vmatpush1.msra.mxu0 0.0
  %104 = vmatprep.subr.mxu0 0.0
  %105 = vmatpush1.msra.mxu0 0.0
  %106 = vmatprep.subr.mxu0 0.0
  %107 = vmatpush1.msra.mxu0 0.0
  %108 = vmatprep.mubr.f32.mxu0 0.0
  %109 = vmatmul.mubr.f32.gmra.mrb[0].mxu0 %v42
  %v110 = vpop.f32.mrb[0].mxu0
  %v111 = vadd.f32 0.0, %v110
  %v112 = vpop.f32.mrb[0].mxu0
  %113 = vdwg.mxu0
  %v114 = vadd.f32 %v39, %v111
  %vm115 = vcmask 130048
  %116 = vst.msk [vmem:[#allocation2] sm:$0xff] %vm115, %v114
  // Predicated region
  $region34: #{tpu_custom_call.1} parent=0 // pred_check
    %p117 = pneg %p28
  $region35: #{tpu_custom_call.1} parent=0 // pred_check_branch
    %119 = sbr.rel (%p117) target = $region37
  $region36: #{tpu_custom_call.1} parent=0 // pred_region
    %v120 = vld [vmem:[#allocation2] sm:$0xff]
    %v121 = vld [vmem:[%s2] sm:$0x1]
    %v123 = vlaneseq
    %v124 = vshrl.u32 %v123, 7
    %v125 = vsub.s32 0, %v124
    %v126 = vrot.slane %v121, %v125
    %v128 = vadd.f32 %v120, %v126
    %v129 = vmax.f32 %v128, 0.0
    %v130 = vld [vmem:[%s3] sm:$0xff]
    %v131 = vld [vmem:[%s3 + $0x8] sm:$0xff]
    %v132 = vld [vmem:[%s4] sm:$0x1]
    %v134 = vlaneseq
    %v135 = vshrl.u32 %v134, 7
    %v136 = vsub.s32 0, %v135
    %v137 = vrot.slane %v132, %v136
    %v140 = vsel %vm115, %v129, 0
    %142 = vmatprep.subr.mxu0 0.0
    %143 = vmatpush1.msra.mxu0 %v130
    %144 = vmatprep.subr.mxu0 0.0
    %145 = vmatpush1.msra.mxu0 %v131
    %146 = vmatprep.subr.mxu0 0.0
    %147 = vmatpush1.msra.mxu0 0.0
    %148 = vmatprep.subr.mxu0 0.0
    %149 = vmatpush1.msra.mxu0 0.0
    %150 = vmatprep.subr.mxu0 0.0
    %151 = vmatpush1.msra.mxu0 0.0
    %152 = vmatprep.subr.mxu0 0.0
    %153 = vmatpush1.msra.mxu0 0.0
    %154 = vmatprep.subr.mxu0 0.0
    %155 = vmatpush1.msra.mxu0 0.0
    %156 = vmatprep.subr.mxu0 0.0
    %157 = vmatpush1.msra.mxu0 0.0
    %158 = vmatprep.subr.mxu0 0.0
    %159 = vmatpush1.msra.mxu0 0.0
    %160 = vmatprep.subr.mxu0 0.0
    %161 = vmatpush1.msra.mxu0 0.0
    %162 = vmatprep.subr.mxu0 0.0
    %163 = vmatpush1.msra.mxu0 0.0
    %164 = vmatprep.subr.mxu0 0.0
    %165 = vmatpush1.msra.mxu0 0.0
    %166 = vmatprep.subr.mxu0 0.0
    %167 = vmatpush1.msra.mxu0 0.0
    %168 = vmatprep.subr.mxu0 0.0
    %169 = vmatpush1.msra.mxu0 0.0
    %170 = vmatprep.subr.mxu0 0.0
    %171 = vmatpush1.msra.mxu0 0.0
    %172 = vmatprep.subr.mxu0 0.0
    %173 = vmatpush1.msra.mxu0 0.0
    %174 = vmatprep.subr.mxu0 0.0
    %175 = vmatpush1.msra.mxu0 0.0
    %176 = vmatprep.subr.mxu0 0.0
    %177 = vmatpush1.msra.mxu0 0.0
    %178 = vmatprep.subr.mxu0 0.0
    %179 = vmatpush1.msra.mxu0 0.0
    %180 = vmatprep.subr.mxu0 0.0
    %181 = vmatpush1.msra.mxu0 0.0
    %182 = vmatprep.subr.mxu0 0.0
    %183 = vmatpush1.msra.mxu0 0.0
    %184 = vmatprep.subr.mxu0 0.0
    %185 = vmatpush1.msra.mxu0 0.0
    %186 = vmatprep.subr.mxu0 0.0
    %187 = vmatpush1.msra.mxu0 0.0
    %188 = vmatprep.subr.mxu0 0.0
    %189 = vmatpush1.msra.mxu0 0.0
    %190 = vmatprep.subr.mxu0 0.0
    %191 = vmatpush1.msra.mxu0 0.0
    %192 = vmatprep.subr.mxu0 0.0
    %193 = vmatpush1.msra.mxu0 0.0
    %194 = vmatprep.subr.mxu0 0.0
    %195 = vmatpush1.msra.mxu0 0.0
    %196 = vmatprep.subr.mxu0 0.0
    %197 = vmatpush1.msra.mxu0 0.0
    %198 = vmatprep.subr.mxu0 0.0
    %199 = vmatpush1.msra.mxu0 0.0
    %200 = vmatprep.subr.mxu0 0.0
    %201 = vmatpush1.msra.mxu0 0.0
    %202 = vmatprep.subr.mxu0 0.0
    %203 = vmatpush1.msra.mxu0 0.0
    %204 = vmatprep.subr.mxu0 0.0
    %205 = vmatpush1.msra.mxu0 0.0
    %206 = vmatprep.mubr.f32.mxu0 0.0
    %207 = vmatmul.mubr.f32.gmra.mrb[0].mxu0 %v140
    %v208 = vpop.f32.mrb[0].mxu0
    %v209 = vadd.f32 %v137, %v208
    %v210 = vpop.f32.mrb[0].mxu0
    %211 = vdwg.mxu0
    %v212 = vmax.f32 %v209, 0.0
    %v213 = vld [vmem:[%s5] sm:$0xff]
    %v214 = vld [vmem:[#allocation3] sm:$0x1]
    %v216 = vlaneseq
    %v217 = vshrl.u32 %v216, 7
    %v218 = vsub.s32 0, %v217
    %v219 = vrot.slane %v214, %v218
    %vm221 = vcmask 64512
    %v223 = vsel %vm221, %v212, 0
    %225 = vmatprep.subr.mxu0 0.0
    %226 = vmatpush1.msra.mxu0 %v213
    %227 = vmatprep.subr.mxu0 0.0
    %228 = vmatpush1.msra.mxu0 0.0
    %229 = vmatprep.subr.mxu0 0.0
    %230 = vmatpush1.msra.mxu0 0.0
    %231 = vmatprep.subr.mxu0 0.0
    %232 = vmatpush1.msra.mxu0 0.0
    %233 = vmatprep.subr.mxu0 0.0
    %234 = vmatpush1.msra.mxu0 0.0
    %235 = vmatprep.subr.mxu0 0.0
    %236 = vmatpush1.msra.mxu0 0.0
    %237 = vmatprep.subr.mxu0 0.0
    %238 = vmatpush1.msra.mxu0 0.0
    %239 = vmatprep.subr.mxu0 0.0
    %240 = vmatpush1.msra.mxu0 0.0
    %241 = vmatprep.subr.mxu0 0.0
    %242 = vmatpush1.msra.mxu0 0.0
    %243 = vmatprep.subr.mxu0 0.0
    %244 = vmatpush1.msra.mxu0 0.0
    %245 = vmatprep.subr.mxu0 0.0
    %246 = vmatpush1.msra.mxu0 0.0
    %247 = vmatprep.subr.mxu0 0.0
    %248 = vmatpush1.msra.mxu0 0.0
    %249 = vmatprep.subr.mxu0 0.0
    %250 = vmatpush1.msra.mxu0 0.0
    %251 = vmatprep.subr.mxu0 0.0
    %252 = vmatpush1.msra.mxu0 0.0
    %253 = vmatprep.subr.mxu0 0.0
    %254 = vmatpush1.msra.mxu0 0.0
    %255 = vmatprep.subr.mxu0 0.0
    %256 = vmatpush1.msra.mxu0 0.0
    %257 = vmatprep.subr.mxu0 0.0
    %258 = vmatpush1.msra.mxu0 0.0
    %259 = vmatprep.subr.mxu0 0.0
    %260 = vmatpush1.msra.mxu0 0.0
    %261 = vmatprep.subr.mxu0 0.0
    %262 = vmatpush1.msra.mxu0 0.0
    %263 = vmatprep.subr.mxu0 0.0
    %264 = vmatpush1.msra.mxu0 0.0
    %265 = vmatprep.subr.mxu0 0.0
    %266 = vmatpush1.msra.mxu0 0.0
    %267 = vmatprep.subr.mxu0 0.0
    %268 = vmatpush1.msra.mxu0 0.0
    %269 = vmatprep.subr.mxu0 0.0
    %270 = vmatpush1.msra.mxu0 0.0
    %271 = vmatprep.subr.mxu0 0.0
    %272 = vmatpush1.msra.mxu0 0.0
    %273 = vmatprep.subr.mxu0 0.0
    %274 = vmatpush1.msra.mxu0 0.0
    %275 = vmatprep.subr.mxu0 0.0
    %276 = vmatpush1.msra.mxu0 0.0
    %277 = vmatprep.subr.mxu0 0.0
    %278 = vmatpush1.msra.mxu0 0.0
    %279 = vmatprep.subr.mxu0 0.0
    %280 = vmatpush1.msra.mxu0 0.0
    %281 = vmatprep.subr.mxu0 0.0
    %282 = vmatpush1.msra.mxu0 0.0
    %283 = vmatprep.subr.mxu0 0.0
    %284 = vmatpush1.msra.mxu0 0.0
    %285 = vmatprep.subr.mxu0 0.0
    %286 = vmatpush1.msra.mxu0 0.0
    %287 = vmatprep.subr.mxu0 0.0
    %288 = vmatpush1.msra.mxu0 0.0
    %289 = vmatprep.mubr.f32.mxu0 0.0
    %290 = vmatmul.mubr.f32.gmra.mrb[0].mxu0 %v223
    %v291 = vpop.f32.mrb[0].mxu0
    %v292 = vadd.f32 %v219, %v291
    %v293 = vpop.f32.mrb[0].mxu0
    %294 = vdwg.mxu0
    %vm295 = vcmask 7168
    %296 = vst.msk [vmem:[%s7] sm:$0xff] %vm295, %v292
  $region37: #{tpu_custom_call.1} parent=0 // pred_fallthru
    _
  // Predicated region
  $region38: #{tpu_custom_call.1} parent=0 // pred_check
    _
  $region39: #{tpu_custom_call.1} parent=0 // pred_check_branch
    %298 = sbr.rel (0) target = $region41
  $region40: #{tpu_custom_call.1} parent=0 // pred_region
    _
  $region41: #{tpu_custom_call.1} parent=0 // pred_fallthru
    _
  // Predicated region
  $region42: #{tpu_custom_call.1} parent=0 // pred_check
    _
  $region43: #{tpu_custom_call.1} parent=0 // pred_check_branch
    %300 = sbr.rel (0) target = $region45
  $region44: #{tpu_custom_call.1} parent=0 // pred_region
    _
  $region45: #{tpu_custom_call.1} parent=0 // pred_fallthru
    _

</llo_original>
